<compile_context>
chip_gen: v5e
topology: v5e:2x2
jax: 0.10.0
libtpu: 0.0.40
codegen_flags: <defaults>
</compile_context>

<pallas_src>
import functools

import jax
import jax.numpy as jnp
from jax.experimental import pallas as pl
from jax.experimental.pallas import tpu as pltpu


def sinusoidal_positional_encoding(max_len: int, dim: int) -> jnp.ndarray:
    """Standard transformer table: pe[p, 2i] = sin(p*w_i), pe[p, 2i+1] = cos(p*w_i)."""
    position = jnp.arange(max_len, dtype=jnp.float32)[:, None]               # (max_len, 1)
    div_term = jnp.exp(
        jnp.arange(0, dim, 2, dtype=jnp.float32) * (-jnp.log(10000.0) / dim)
    )                                                                        # (ceil(dim/2),)
    angles = position * div_term[None, :]                                    # (max_len, ceil(dim/2))
    pe = jnp.zeros((max_len, dim), dtype=jnp.float32)
    pe = pe.at[:, 0::2].set(jnp.sin(angles))
    pe = pe.at[:, 1::2].set(jnp.cos(angles)[:, : dim // 2])                  # odd-dim safe
    return pe


def _gather_kernel(pos_ref, table_ref, out_ref, copy_sems):
    # pos_ref   : SMEM (n_pad,)      int32   -- scalar-prefetched, clamped flat positions
    # table_ref : HBM  (max_len, D)  float32 -- full table, never resident in VMEM
    # out_ref   : VMEM (G, D)        float32 -- output block for this grid step
    # copy_sems : DMA semaphores (G,)
    g_rows = out_ref.shape[0]
    base = pl.program_id(0) * g_rows

    # Issue all G row copies (HBM table row -> VMEM output row), then wait.
    def _start(g, carry):
        row = pos_ref[base + g]
        pltpu.make_async_copy(
            table_ref.at[pl.ds(row, 1), :],
            out_ref.at[pl.ds(g, 1), :],
            copy_sems.at[g],
        ).start()
        return carry

    jax.lax.fori_loop(0, g_rows, _start, 0)

    def _wait(g, carry):
        pltpu.make_async_copy(
            table_ref.at[pl.ds(0, 1), :],       # shape stand-in; sem carries identity
            out_ref.at[pl.ds(g, 1), :],
            copy_sems.at[g],
        ).wait()
        return carry

    jax.lax.fori_loop(0, g_rows, _wait, 0)
    # TODO(synk): for table-free operation, compute sin/cos on the fly from the
    # scalar-prefetched positions (VPU/EUP only) instead of gathering from HBM.


def _round_up(x: int, m: int) -> int:
    return ((x + m - 1) // m) * m


@functools.partial(jax.jit, static_argnames=("rows_per_step",))
def sinusoidal_positional_encoding_lookup(
    pos: jnp.ndarray, table: jnp.ndarray, *, rows_per_step: int = 128
) -> jnp.ndarray:
    """Equivalent of SinusoidalPositionalEncoding.forward: (B, L) int -> (B, L, D)."""
    B, L = pos.shape
    max_len, D = table.shape
    n = B * L

    # Clamp (torch.gather would raise on OOB; TPU DMA would otherwise fault) and flatten.
    pos_flat = jnp.clip(pos.astype(jnp.int32), 0, max_len - 1).reshape(n)

    # G rows gathered per grid step; cap so large N produces many (shardable) steps.
    G = min(_round_up(rows_per_step, 8), _round_up(n, 8))
    n_pad = _round_up(n, G)
    if n_pad != n:
        pos_flat = jnp.pad(pos_flat, (0, n_pad - n))      # padded rows gather row 0, sliced off
    grid = (n_pad // G,)

    out_flat = pl.pallas_call(
        _gather_kernel,
        out_shape=jax.ShapeDtypeStruct((n_pad, D), table.dtype),
        grid_spec=pltpu.PrefetchScalarGridSpec(
            num_scalar_prefetch=1,                         # pos_flat -> SMEM
            grid=grid,
            in_specs=[
                pl.BlockSpec(memory_space=pl.ANY),         # table stays in HBM, manual DMA
            ],
            out_specs=pl.BlockSpec((G, D), lambda i, pos: (i, 0)),
            scratch_shapes=[pltpu.SemaphoreType.DMA((G,))],
        ),
        compiler_params=pltpu.CompilerParams(
            dimension_semantics=("parallel",),             # steps independent; v7x TC sharding
        ),
    )(pos_flat, table)

    return out_flat[:n].reshape(B, L, D)


if __name__ == "__main__":
    B, L = 2, 8
    DIM, MAX_LEN = 32, 64

    # Deterministic "parameters" (the registered buffer) and inputs.
    table = sinusoidal_positional_encoding(MAX_LEN, DIM)          # (max_len, D)
    key = jax.random.PRNGKey(0)
    pos = jax.random.randint(key, (B, L), 0, MAX_LEN, dtype=jnp.int32)

    out = sinusoidal_positional_encoding_lookup(pos, table)
    out = jax.block_until_ready(out)

    # Pure-JAX reference of the torch.gather semantics.
    ref = jnp.take(table, pos, axis=0)                            # (B, L, D)
    assert out.shape == (B, L, DIM)
    assert out.dtype == jnp.float32
    assert jnp.allclose(out, ref, atol=1e-6, rtol=1e-6), "mismatch vs reference gather"

    print("KERNEL_OK")
</pallas_src>

<mosaic_0001>
module attributes {stable_mosaic.version = 11 : i64} {
  func.func @_gather_kernel(%arg0: i32, %arg1: memref<16xi32, #tpu.memory_space<smem>>, %arg2: memref<64x32xf32, #tpu.memory_space<any>>, %arg3: memref<16x32xf32, #tpu.memory_space<vmem>>, %arg4: memref<16x!tpu.dma_semaphore, #tpu.memory_space<semaphore_mem>>) attributes {dimension_semantics = [#tpu.dimension_semantics<parallel>], iteration_bounds = array<i64: 1>, scalar_prefetch = 1 : i64, scratch_operands = 1 : i64, tpu.core_type = #tpu.core_type<tc>, window_params = [{}, {transform_indices = @transform_1, window_bounds = array<i64: 16, 32>}]} {
    %c16_i32 = arith.constant 16 : i32
    %0 = arith.muli %arg0, %c16_i32 : i32
    %c0_i32 = arith.constant 0 : i32
    %c16_i32_0 = arith.constant 16 : i32
    %1 = arith.addi %c0_i32, %c16_i32_0 : i32
    %c1_i32 = arith.constant 1 : i32
    scf.for %arg5 = %c0_i32 to %1 step %c1_i32  : i32 {
      %3 = arith.addi %0, %arg5 : i32
      %4 = arith.index_cast %3 : i32 to index
      %5 = memref.load %arg1[%4] : memref<16xi32, #tpu.memory_space<smem>>
      %c0_i32_6 = arith.constant 0 : i32
      %6 = tpu.memref_slice %arg2[%5, %c0_i32_6] : memref<64x32xf32, #tpu.memory_space<any>> -> memref<1x32xf32, #tpu.memory_space<any>>
      %c0_i32_7 = arith.constant 0 : i32
      %7 = tpu.memref_slice %arg3[%arg5, %c0_i32_7] : memref<16x32xf32, #tpu.memory_space<vmem>> -> memref<1x32xf32, #tpu.memory_space<vmem>>
      %8 = tpu.memref_slice %arg4[%arg5] : memref<16x!tpu.dma_semaphore, #tpu.memory_space<semaphore_mem>> -> memref<1x!tpu.dma_semaphore, #tpu.memory_space<semaphore_mem>>
      %9 = tpu.memref_squeeze %8 : memref<1x!tpu.dma_semaphore, #tpu.memory_space<semaphore_mem>> -> memref<!tpu.dma_semaphore, #tpu.memory_space<semaphore_mem>>
      tpu.enqueue_dma source(%6 : memref<1x32xf32, #tpu.memory_space<any>>) target(%7 : memref<1x32xf32, #tpu.memory_space<vmem>>) target_semaphore(%9 : memref<!tpu.dma_semaphore, #tpu.memory_space<semaphore_mem>>)
    }
    %c16_i32_1 = arith.constant 16 : i32
    %c0_i32_2 = arith.constant 0 : i32
    %c16_i32_3 = arith.constant 16 : i32
    %2 = arith.addi %c0_i32_2, %c16_i32_3 : i32
    %c1_i32_4 = arith.constant 1 : i32
    scf.for %arg5 = %c0_i32_2 to %2 step %c1_i32_4  : i32 {
      %c0_i32_6 = arith.constant 0 : i32
      %c0_i32_7 = arith.constant 0 : i32
      %3 = tpu.memref_slice %arg2[%c0_i32_6, %c0_i32_7] : memref<64x32xf32, #tpu.memory_space<any>> -> memref<1x32xf32, #tpu.memory_space<any>>
      %c0_i32_8 = arith.constant 0 : i32
      %4 = tpu.memref_slice %arg3[%arg5, %c0_i32_8] : memref<16x32xf32, #tpu.memory_space<vmem>> -> memref<1x32xf32, #tpu.memory_space<vmem>>
      %5 = tpu.memref_slice %arg4[%arg5] : memref<16x!tpu.dma_semaphore, #tpu.memory_space<semaphore_mem>> -> memref<1x!tpu.dma_semaphore, #tpu.memory_space<semaphore_mem>>
      %6 = tpu.memref_squeeze %5 : memref<1x!tpu.dma_semaphore, #tpu.memory_space<semaphore_mem>> -> memref<!tpu.dma_semaphore, #tpu.memory_space<semaphore_mem>>
      tpu.wait_dma2 semaphore(%6 : memref<!tpu.dma_semaphore, #tpu.memory_space<semaphore_mem>>) src(%3 : memref<1x32xf32, #tpu.memory_space<any>>) dst(%4 : memref<1x32xf32, #tpu.memory_space<vmem>>)
    }
    %c16_i32_5 = arith.constant 16 : i32
    return
  }
  func.func @transform_1(%arg0: i32, %arg1: memref<16xi32, #tpu.memory_space<smem>>) -> (i32, i32) {
    %c0_i32 = arith.constant 0 : i32
    %c0_i32_0 = arith.constant 0 : i32
    return %arg0, %c0_i32 : i32, i32
  }
}

</mosaic_0001>

<llo_original>
// kernel: sinusoidal_positional_encoding_lookup.1
$region0: #{sinusoidal_positional_encoding_lookup.1}
  #allocation0 [shape = 'u32[]', space=smem, size = 0x4, offset = 0x4, fixed_abs, tag = 'smem constant byte address 0x4 - core index']
  #allocation1 [shape = 'u32[72,128]{1,0:T(1,128)}', space=vmem, size = 0x9000, scoped, tag = 'internal scratch']
  #allocation2 [shape = 's32[16]{0}', space=sflag, size = 0x40, scoped, tag = 'scratch operand']
  #allocation3 [shape = 's32[1]{0}', space=sflag, size = 0x4, scoped, tag = 'scoped memory for sinusoidal_positional_encoding_lookup.1']
  #allocation4 [shape = 'u8[512]{0}', space=smem, size = 0x200, scoped, tag = 'prefetched SMEM operand 0']
  #allocation7 [shape = 's32[]', space=sflag, size = 0x4, offset = 0, fixed_abs, tag = 'sflag constant byte address 0x0 - dummy sync flag']
  %s0 = inlined_call_operand.vmem [shape: s32[16], index: 0, kind: input, shape index: {}]
  %s1 = inlined_call_operand.vmem [shape: f32[64,32], index: 1, kind: input, shape index: {}]
  %s2 = inlined_call_operand.hbm [shape: f32[16,32], index: 2, kind: output, shape index: {}]
  %s3 = sld [smem:[#allocation0]]
  $region54: #{sinusoidal_positional_encoding_lookup.1} parent=0
    _
  %s5 = ssub.s32 1, %s3
  %s6 = scalar_select 0, %s5, %s3
  %s8 = sshll.u32 %s0, 4
  %s9 = int_to_ptr.vmem [resolvable:$true] %s8
  %11 = dma.vmem_to_smem %s9, 16, [#allocation4], [#allocation3]
  %13 = dma.done [#allocation3], 16
  %14 = sfence
  $region1: #{sinusoidal_positional_encoding_lookup.1} parent=0
    #allocation5 [shape = 'u8[8192]{0}', space=vmem, size = 0x2000, scoped, tag = 'output window, operand 0, single buffered']
    #allocation6 [shape = 's32[1]{0}', space=sflag, size = 0x4, scoped, tag = 'scoped memory for sinusoidal_positional_encoding_lookup.1']
    %15 = vsyncpa [#allocation6], 0
    %s16 = smul.u32 0, 16
    loop: start=0, step=1, limit=16
    $region2: #{sinusoidal_positional_encoding_lookup.1} parent=1 // loop_pre_header
      _
    $region3: #{sinusoidal_positional_encoding_lookup.1} parent=1 // loop_header
      %s18 = sphi 0, %s22
      %p19 = scmp.ge.s32.totalorder %s18, 16
    $region4: #{sinusoidal_positional_encoding_lookup.1} parent=1 // loop_header_branch
      %21 = sbr.rel (%p19) target = $region8
    $region5: #{sinusoidal_positional_encoding_lookup.1} parent=1 // loop_body
      %s23 = sadd.s32 %s16, %s18
      %s24 = sld [smem:[#allocation4 + %s23]]
      %s25 = scalar_lea.vmem %s1, %s24
      %s26 = scalar_lea.vmem [#allocation5], %s18
      %s27 = scalar_lea.sflag [#allocation2], %s18
      // Predicated region
      $region9: #{sinusoidal_positional_encoding_lookup.1} parent=5 // pred_check
        _
      $region10: #{sinusoidal_positional_encoding_lookup.1} parent=5 // pred_check_branch
        %29 = sbr.rel target = $region12
      $region11: #{sinusoidal_positional_encoding_lookup.1} parent=5 // pred_region
        // Predicated region
        $region24: #{sinusoidal_positional_encoding_lookup.1} parent=11 // pred_check
          _
        $region25: #{sinusoidal_positional_encoding_lookup.1} parent=11 // pred_check_branch
          %45 = sbr.rel (0) target = $region27
        $region26: #{sinusoidal_positional_encoding_lookup.1} parent=11 // pred_region
          %s47 = ssub.s32 2, 1
          loop: start=0, step=1, limit=1
          $region28: #{sinusoidal_positional_encoding_lookup.1} parent=26 // loop_pre_header
            _
          $region29: #{sinusoidal_positional_encoding_lookup.1} parent=26 // loop_header
            %s49 = sphi 0, %s53
            %p50 = scmp.ge.s32.totalorder %s49, 1
            %s54 = sphi %s25, %s25
            %s55 = sphi %s26, %s26
          $region30: #{sinusoidal_positional_encoding_lookup.1} parent=26 // loop_header_branch
            %52 = sbr.rel (%p50) target = $region34
          $region31: #{sinusoidal_positional_encoding_lookup.1} parent=26 // loop_body
            %v56 = vld [vmem:[%s54] sm:%s47]
            %57 = vst [vmem:[%s55] sm:%s47] %v56
          $region32: #{sinusoidal_positional_encoding_lookup.1} parent=26 // loop_footer
            %s53 = sadd.s32 1, %s49
          $region33: #{sinusoidal_positional_encoding_lookup.1} parent=26 // loop_footer_branch
            %48 = sbr.rel target = $region29
          $region34: #{sinusoidal_positional_encoding_lookup.1} parent=26 // loop_exit
            _
        $region27: #{sinusoidal_positional_encoding_lookup.1} parent=11 // pred_fallthru
          _
      $region12: #{sinusoidal_positional_encoding_lookup.1} parent=5 // pred_fallthru
        _
      // Predicated region
      $region13: #{sinusoidal_positional_encoding_lookup.1} parent=5 // pred_check
        _
      $region14: #{sinusoidal_positional_encoding_lookup.1} parent=5 // pred_check_branch
        %31 = sbr.rel (0) target = $region16
      $region15: #{sinusoidal_positional_encoding_lookup.1} parent=5 // pred_region
        %s33 = ssub.s32 2, 1
        loop: start=0, step=1, limit=1
        $region17: #{sinusoidal_positional_encoding_lookup.1} parent=15 // loop_pre_header
          _
        $region18: #{sinusoidal_positional_encoding_lookup.1} parent=15 // loop_header
          %s35 = sphi 0, %s39
          %p36 = scmp.ge.s32.totalorder %s35, 1
          %s40 = sphi %s25, %s25
          %s41 = sphi %s26, %s26
        $region19: #{sinusoidal_positional_encoding_lookup.1} parent=15 // loop_header_branch
          %38 = sbr.rel (%p36) target = $region23
        $region20: #{sinusoidal_positional_encoding_lookup.1} parent=15 // loop_body
          %v42 = vld [vmem:[%s40] sm:%s33]
          %43 = vst [vmem:[%s41] sm:%s33] %v42
        $region21: #{sinusoidal_positional_encoding_lookup.1} parent=15 // loop_footer
          %s39 = sadd.s32 1, %s35
        $region22: #{sinusoidal_positional_encoding_lookup.1} parent=15 // loop_footer_branch
          %34 = sbr.rel target = $region18
        $region23: #{sinusoidal_positional_encoding_lookup.1} parent=15 // loop_exit
          _
      $region16: #{sinusoidal_positional_encoding_lookup.1} parent=5 // pred_fallthru
        _
      // Predicated region
      $region35: #{sinusoidal_positional_encoding_lookup.1} parent=5 // pred_check
        _
      $region36: #{sinusoidal_positional_encoding_lookup.1} parent=5 // pred_check_branch
        %60 = sbr.rel (0) target = $region38
      $region37: #{sinusoidal_positional_encoding_lookup.1} parent=5 // pred_region
        %61 = vsyncadd %s27, 16
      $region38: #{sinusoidal_positional_encoding_lookup.1} parent=5 // pred_fallthru
        _
    $region6: #{sinusoidal_positional_encoding_lookup.1} parent=1 // loop_footer
      %s22 = sadd.s32 1, %s18
    $region7: #{sinusoidal_positional_encoding_lookup.1} parent=1 // loop_footer_branch
      %17 = sbr.rel target = $region3
    $region8: #{sinusoidal_positional_encoding_lookup.1} parent=1 // loop_exit
      _
    loop: start=0, step=1, limit=16
    $region39: #{sinusoidal_positional_encoding_lookup.1} parent=1 // loop_pre_header
      _
    $region40: #{sinusoidal_positional_encoding_lookup.1} parent=1 // loop_header
      %s63 = sphi 0, %s67
      %p64 = scmp.ge.s32.totalorder %s63, 16
    $region41: #{sinusoidal_positional_encoding_lookup.1} parent=1 // loop_header_branch
      %66 = sbr.rel (%p64) target = $region45
    $region42: #{sinusoidal_positional_encoding_lookup.1} parent=1 // loop_body
      %s68 = scalar_lea.sflag [#allocation2], %s63
      %s69 = smul.u32 1, 1
      %s70 = sshll.u32 %s69, 4
      %71 = dma.done %s68, %s70
    $region43: #{sinusoidal_positional_encoding_lookup.1} parent=1 // loop_footer
      %s67 = sadd.s32 1, %s63
    $region44: #{sinusoidal_positional_encoding_lookup.1} parent=1 // loop_footer_branch
      %62 = sbr.rel target = $region40
    $region45: #{sinusoidal_positional_encoding_lookup.1} parent=1 // loop_exit
      _
    // Predicated region
    $region46: #{sinusoidal_positional_encoding_lookup.1} parent=1 // pred_check
      _
    $region47: #{sinusoidal_positional_encoding_lookup.1} parent=1 // pred_check_branch
      %73 = sbr.rel (0) target = $region49
    $region48: #{sinusoidal_positional_encoding_lookup.1} parent=1 // pred_region
      %75 = vsyncadd [#allocation6], 0
      %s76 = sshll.u32 [#allocation5], 4
      %s77 = int_to_ptr.vmem [resolvable:$true] %s76
      %s78 = sshll.u32 %s2, 4
      %s79 = int_to_ptr.hbm [resolvable:$true] %s78
      %84 = dma.vmem_to_hbm [thread:$0]  %s77, 256, %s79, [#allocation6], 128, 128, 8
    $region49: #{sinusoidal_positional_encoding_lookup.1} parent=1 // pred_fallthru
      _
    // Predicated region
    $region50: #{sinusoidal_positional_encoding_lookup.1} parent=1 // pred_check
      _
    $region51: #{sinusoidal_positional_encoding_lookup.1} parent=1 // pred_check_branch
      %86 = sbr.rel (0) target = $region53
    $region52: #{sinusoidal_positional_encoding_lookup.1} parent=1 // pred_region
      %88 = dma.done [#allocation6], 256
    $region53: #{sinusoidal_positional_encoding_lookup.1} parent=1 // pred_fallthru
      _
    %89 = vsyncpa [#allocation6], 1
  %90 = vsyncmov [#allocation2]
  %s91 = vpop.sfrf %90
  %p92 = scmp.eq.s32.totalorder %s91, 0
  %p93 = pneg %p92
  %95 = shalt.err (%p93)
  %s96 = scalar_lea.sflag [#allocation2], 1
  %97 = vsyncmov %s96
  %s98 = vpop.sfrf %97
  %p99 = scmp.eq.s32.totalorder %s98, 0
  %p100 = pneg %p99
  %102 = shalt.err (%p100)
  %s103 = scalar_lea.sflag [#allocation2], 2
  %104 = vsyncmov %s103
  %s105 = vpop.sfrf %104
  %p106 = scmp.eq.s32.totalorder %s105, 0
  %p107 = pneg %p106
  %109 = shalt.err (%p107)
  %s110 = scalar_lea.sflag [#allocation2], 3
  %111 = vsyncmov %s110
  %s112 = vpop.sfrf %111
  %p113 = scmp.eq.s32.totalorder %s112, 0
  %p114 = pneg %p113
  %116 = shalt.err (%p114)
  %s117 = scalar_lea.sflag [#allocation2], 4
  %118 = vsyncmov %s117
  %s119 = vpop.sfrf %118
  %p120 = scmp.eq.s32.totalorder %s119, 0
  %p121 = pneg %p120
  %123 = shalt.err (%p121)
  %s124 = scalar_lea.sflag [#allocation2], 5
  %125 = vsyncmov %s124
  %s126 = vpop.sfrf %125
  %p127 = scmp.eq.s32.totalorder %s126, 0
  %p128 = pneg %p127
  %130 = shalt.err (%p128)
  %s131 = scalar_lea.sflag [#allocation2], 6
  %132 = vsyncmov %s131
  %s133 = vpop.sfrf %132
  %p134 = scmp.eq.s32.totalorder %s133, 0
  %p135 = pneg %p134
  %137 = shalt.err (%p135)
  %s138 = scalar_lea.sflag [#allocation2], 7
  %139 = vsyncmov %s138
  %s140 = vpop.sfrf %139
  %p141 = scmp.eq.s32.totalorder %s140, 0
  %p142 = pneg %p141
  %144 = shalt.err (%p142)
  %s145 = scalar_lea.sflag [#allocation2], 8
  %146 = vsyncmov %s145
  %s147 = vpop.sfrf %146
  %p148 = scmp.eq.s32.totalorder %s147, 0
  %p149 = pneg %p148
  %151 = shalt.err (%p149)
  %s152 = scalar_lea.sflag [#allocation2], 9
  %153 = vsyncmov %s152
  %s154 = vpop.sfrf %153
  %p155 = scmp.eq.s32.totalorder %s154, 0
  %p156 = pneg %p155
  %158 = shalt.err (%p156)
  %s159 = scalar_lea.sflag [#allocation2], 10
  %160 = vsyncmov %s159
  %s161 = vpop.sfrf %160
  %p162 = scmp.eq.s32.totalorder %s161, 0
  %p163 = pneg %p162
  %165 = shalt.err (%p163)
  %s166 = scalar_lea.sflag [#allocation2], 11
  %167 = vsyncmov %s166
  %s168 = vpop.sfrf %167
  %p169 = scmp.eq.s32.totalorder %s168, 0
  %p170 = pneg %p169
  %172 = shalt.err (%p170)
  %s173 = scalar_lea.sflag [#allocation2], 12
  %174 = vsyncmov %s173
  %s175 = vpop.sfrf %174
  %p176 = scmp.eq.s32.totalorder %s175, 0
  %p177 = pneg %p176
  %179 = shalt.err (%p177)
  %s180 = scalar_lea.sflag [#allocation2], 13
  %181 = vsyncmov %s180
  %s182 = vpop.sfrf %181
  %p183 = scmp.eq.s32.totalorder %s182, 0
  %p184 = pneg %p183
  %186 = shalt.err (%p184)
  %s187 = scalar_lea.sflag [#allocation2], 14
  %188 = vsyncmov %s187
  %s189 = vpop.sfrf %188
  %p190 = scmp.eq.s32.totalorder %s189, 0
  %p191 = pneg %p190
  %193 = shalt.err (%p191)
  %s194 = scalar_lea.sflag [#allocation2], 15
  %195 = vsyncmov %s194
  %s196 = vpop.sfrf %195
  %p197 = scmp.eq.s32.totalorder %s196, 0
  %p198 = pneg %p197
  %200 = shalt.err (%p198)

</llo_original>
